<compile_context>
chip_gen: v5e
topology: v5e:2x2
jax: 0.10.0
libtpu: 0.0.40
codegen_flags: <defaults>
</compile_context>

<pallas_src>
import math

import jax
import jax.numpy as jnp
from jax.experimental import pallas as pl
from jax.experimental.pallas import tpu as pltpu

H_PAD = 128     # hidden dim padded to a full lane width
OUT_PAD = 128   # lane-dense output slab; the real q-value lives in column 0


def _round_up(x, m):
    return ((x + m - 1) // m) * m


# ----------------------------------------------------------------------------
# Kernel: whole 3-layer MLP for one batch tile; weights resident in VMEM.
# ----------------------------------------------------------------------------
def critic_kernel(s_ref, a_ref, w1s_ref, w1a_ref, b1_ref,
                  w2_ref, b2_ref, w3_ref, b3_ref, o_ref):
    # fc1 as a split dot (no concat): h1 = s @ W1s + a @ W1a + b1
    s = s_ref[...].astype(jnp.bfloat16)                                # (Bt, S)
    a = a_ref[...].astype(jnp.bfloat16)                                # (Bt, A)
    h1 = jnp.dot(s, w1s_ref[...], preferred_element_type=jnp.float32)
    h1 = h1 + jnp.dot(a, w1a_ref[...], preferred_element_type=jnp.float32)
    h1 = jnp.maximum(h1 + b1_ref[...], 0.0)                            # (Bt, 128) f32

    h2 = jnp.dot(h1.astype(jnp.bfloat16), w2_ref[...],
                 preferred_element_type=jnp.float32) + b2_ref[...]
    h2 = jnp.maximum(h2, 0.0)                                          # (Bt, 128) f32

    # Lane-dense final layer: W3 is (128, 128) with only column 0 nonzero.
    q = jnp.dot(h2.astype(jnp.bfloat16), w3_ref[...],
                preferred_element_type=jnp.float32) + b3_ref[...]      # (Bt, 128)
    o_ref[...] = q


# ----------------------------------------------------------------------------
# Wrapper: batch tiling + resident-weight BlockSpecs.
# ----------------------------------------------------------------------------
def critic_forward(state, action, prepared_params, *, block_b=512):
    w1s, w1a, b1, w2, b2, w3, b3 = prepared_params
    B, S = state.shape
    A = action.shape[1]

    # Batch tile: multiple of 8 sublanes, capped at block_b rows.
    Bt = min(block_b, _round_up(B, 8))
    B_pad = _round_up(B, Bt)
    state_p = jnp.pad(state.astype(jnp.float32), ((0, B_pad - B), (0, 0)))
    action_p = jnp.pad(action.astype(jnp.float32), ((0, B_pad - B), (0, 0)))

    def row_spec(shape):
        return pl.BlockSpec(shape, lambda i: (i, 0))

    def resident(arr):
        # Full-array block, constant index -> DMA'd once, stays in VMEM.
        return pl.BlockSpec(arr.shape, lambda i: (0, 0))

    q_full = pl.pallas_call(
        critic_kernel,
        out_shape=jax.ShapeDtypeStruct((B_pad, OUT_PAD), jnp.float32),
        grid=(B_pad // Bt,),
        in_specs=[
            row_spec((Bt, S)),
            row_spec((Bt, A)),
            resident(w1s), resident(w1a), resident(b1),
            resident(w2), resident(b2),
            resident(w3), resident(b3),
        ],
        out_specs=row_spec((Bt, OUT_PAD)),
        compiler_params=pltpu.CompilerParams(
            dimension_semantics=("parallel",),          # shard batch tiles across TCs
            vmem_limit_bytes=32 * 1024 * 1024,
        ),
    )(state_p, action_p, w1s, w1a, b1, w2, b2, w3, b3)

    return q_full[:B, :1]


# ----------------------------------------------------------------------------
# Deterministic parameter init, mirroring Critic.__init__ / reset_parameters.
# NOTE: PyTorch's hidden_init uses weight.size()[0] == out_features as "fan_in"
# (quirk of the reference code); replicated exactly.
# ----------------------------------------------------------------------------
def init_critic_params(state_size, action_size, hidden_size=32, seed=0):
    key = jax.random.PRNGKey(seed)
    ks = jax.random.split(key, 6)
    in1 = state_size + action_size

    def uniform(k, shape, lim):
        return jax.random.uniform(k, shape, jnp.float32, minval=-lim, maxval=lim)

    # fc1: weight ~ U(+-1/sqrt(out_features)); bias default U(+-1/sqrt(in_features)).
    w1 = uniform(ks[0], (in1, hidden_size), 1.0 / math.sqrt(hidden_size))
    b1 = uniform(ks[1], (1, hidden_size), 1.0 / math.sqrt(in1))
    # fc2
    w2 = uniform(ks[2], (hidden_size, hidden_size), 1.0 / math.sqrt(hidden_size))
    b2 = uniform(ks[3], (1, hidden_size), 1.0 / math.sqrt(hidden_size))
    # fc3: weight ~ U(-0.003, 0.003); bias default U(+-1/sqrt(hidden_size))
    w3 = uniform(ks[4], (hidden_size, 1), 0.003)
    b3 = uniform(ks[5], (1, 1), 1.0 / math.sqrt(hidden_size))
    return (w1, b1, w2, b2, w3, b3)


def prepare_params(params, state_size, action_size, hidden_size):
    """Zero-pad hidden/output dims to lane width, split W1, cast weights to bf16."""
    w1, b1, w2, b2, w3, b3 = params
    w1p = jnp.zeros((state_size + action_size, H_PAD), jnp.float32)
    w1p = w1p.at[:, :hidden_size].set(w1)
    w1s = w1p[:state_size].astype(jnp.bfloat16)        # (S, 128)
    w1a = w1p[state_size:].astype(jnp.bfloat16)        # (A, 128)
    b1p = jnp.zeros((1, H_PAD), jnp.float32).at[:, :hidden_size].set(b1)

    w2p = jnp.zeros((H_PAD, H_PAD), jnp.float32)
    w2p = w2p.at[:hidden_size, :hidden_size].set(w2).astype(jnp.bfloat16)
    b2p = jnp.zeros((1, H_PAD), jnp.float32).at[:, :hidden_size].set(b2)

    w3p = jnp.zeros((H_PAD, OUT_PAD), jnp.float32)
    w3p = w3p.at[:hidden_size, :1].set(w3).astype(jnp.bfloat16)
    b3p = jnp.zeros((1, OUT_PAD), jnp.float32).at[:, :1].set(b3)
    return (w1s, w1a, b1p, w2p, b2p, w3p, b3p)


# ----------------------------------------------------------------------------
if __name__ == "__main__":
    STATE_SIZE = 8
    ACTION_SIZE = 4
    HIDDEN = 32
    BATCH = 2

    params = init_critic_params(STATE_SIZE, ACTION_SIZE, HIDDEN, seed=0)
    prepared = prepare_params(params, STATE_SIZE, ACTION_SIZE, HIDDEN)

    key = jax.random.PRNGKey(0)
    k_s, k_a = jax.random.split(key)
    state = jax.random.normal(k_s, (BATCH, STATE_SIZE), jnp.float32)
    action = jax.random.normal(k_a, (BATCH, ACTION_SIZE), jnp.float32)

    q = critic_forward(state, action, prepared)
    q = jax.block_until_ready(q)

    # Pure-JAX f32 reference of the same math (loose tolerance: bf16 matmuls).
    w1, b1, w2, b2, w3, b3 = params
    x = jnp.concatenate([state, action], axis=-1)
    h1 = jnp.maximum(x @ w1 + b1, 0.0)
    h2 = jnp.maximum(h1 @ w2 + b2, 0.0)
    q_ref = h2 @ w3 + b3

    assert q.shape == (BATCH, 1), q.shape
    assert jnp.allclose(q, q_ref, atol=2e-2, rtol=2e-2), (q, q_ref)

    print("KERNEL_OK")
</pallas_src>

<mosaic_0001>
module attributes {stable_mosaic.version = 11 : i64} {
  func.func @critic_kernel(%arg0: i32, %arg1: memref<8x8xf32, #tpu.memory_space<vmem>>, %arg2: memref<8x4xf32, #tpu.memory_space<vmem>>, %arg3: memref<8x128xbf16, #tpu.memory_space<vmem>>, %arg4: memref<4x128xbf16, #tpu.memory_space<vmem>>, %arg5: memref<1x128xf32, #tpu.memory_space<vmem>>, %arg6: memref<128x128xbf16, #tpu.memory_space<vmem>>, %arg7: memref<1x128xf32, #tpu.memory_space<vmem>>, %arg8: memref<128x128xbf16, #tpu.memory_space<vmem>>, %arg9: memref<1x128xf32, #tpu.memory_space<vmem>>, %arg10: memref<8x128xf32, #tpu.memory_space<vmem>>) attributes {dimension_semantics = [#tpu.dimension_semantics<parallel>], iteration_bounds = array<i64: 1>, scalar_prefetch = 0 : i64, scratch_operands = 0 : i64, tpu.core_type = #tpu.core_type<tc>, window_params = [{transform_indices = @transform_0, window_bounds = array<i64: 8, 8>}, {transform_indices = @transform_1, window_bounds = array<i64: 8, 4>}, {pipeline_mode = #tpu.pipeline_mode<synchronous>, transform_indices = @transform_2, window_bounds = array<i64: 8, 128>}, {pipeline_mode = #tpu.pipeline_mode<synchronous>, transform_indices = @transform_3, window_bounds = array<i64: 4, 128>}, {pipeline_mode = #tpu.pipeline_mode<synchronous>, transform_indices = @transform_4, window_bounds = array<i64: 1, 128>}, {pipeline_mode = #tpu.pipeline_mode<synchronous>, transform_indices = @transform_5, window_bounds = array<i64: 128, 128>}, {pipeline_mode = #tpu.pipeline_mode<synchronous>, transform_indices = @transform_6, window_bounds = array<i64: 1, 128>}, {pipeline_mode = #tpu.pipeline_mode<synchronous>, transform_indices = @transform_7, window_bounds = array<i64: 128, 128>}, {pipeline_mode = #tpu.pipeline_mode<synchronous>, transform_indices = @transform_8, window_bounds = array<i64: 1, 128>}, {transform_indices = @transform_9, window_bounds = array<i64: 8, 128>}]} {
    %c0 = arith.constant 0 : index
    %c0_0 = arith.constant 0 : index
    %0 = vector.load %arg1[%c0, %c0_0] : memref<8x8xf32, #tpu.memory_space<vmem>>, vector<8x8xf32>
    %1 = arith.truncf %0 : vector<8x8xf32> to vector<8x8xbf16>
    %c0_1 = arith.constant 0 : index
    %c0_2 = arith.constant 0 : index
    %2 = vector.load %arg2[%c0_1, %c0_2] : memref<8x4xf32, #tpu.memory_space<vmem>>, vector<8x4xf32>
    %3 = arith.truncf %2 : vector<8x4xf32> to vector<8x4xbf16>
    %c0_3 = arith.constant 0 : index
    %c0_4 = arith.constant 0 : index
    %4 = vector.load %arg3[%c0_3, %c0_4] : memref<8x128xbf16, #tpu.memory_space<vmem>>, vector<8x128xbf16>
    %cst = arith.constant dense<0.000000e+00> : vector<8x128xf32>
    %5 = tpu.matmul %1, %4, %cst {dimension_numbers = #tpu.dot_dimension_numbers<[1], [0], [0], [1], [0, 0, 1, 1], [], []>} : vector<8x8xbf16>, vector<8x128xbf16>, vector<8x128xf32> -> vector<8x128xf32>
    %c0_5 = arith.constant 0 : index
    %c0_6 = arith.constant 0 : index
    %6 = vector.load %arg4[%c0_5, %c0_6] : memref<4x128xbf16, #tpu.memory_space<vmem>>, vector<4x128xbf16>
    %cst_7 = arith.constant dense<0.000000e+00> : vector<8x128xf32>
    %7 = tpu.matmul %3, %6, %cst_7 {dimension_numbers = #tpu.dot_dimension_numbers<[1], [0], [0], [1], [0, 0, 1, 1], [], []>} : vector<8x4xbf16>, vector<4x128xbf16>, vector<8x128xf32> -> vector<8x128xf32>
    %8 = arith.addf %5, %7 : vector<8x128xf32>
    %c0_8 = arith.constant 0 : index
    %c0_9 = arith.constant 0 : index
    %9 = vector.load %arg5[%c0_8, %c0_9] : memref<1x128xf32, #tpu.memory_space<vmem>>, vector<1x128xf32>
    %10 = vector.broadcast %9 : vector<1x128xf32> to vector<8x128xf32>
    %11 = arith.addf %8, %10 : vector<8x128xf32>
    %cst_10 = arith.constant 0.000000e+00 : f32
    %12 = vector.broadcast %cst_10 : f32 to vector<8x128xf32>
    %13 = arith.maximumf %11, %12 : vector<8x128xf32>
    %14 = arith.truncf %13 : vector<8x128xf32> to vector<8x128xbf16>
    %c0_11 = arith.constant 0 : index
    %c0_12 = arith.constant 0 : index
    %15 = vector.load %arg6[%c0_11, %c0_12] : memref<128x128xbf16, #tpu.memory_space<vmem>>, vector<128x128xbf16>
    %cst_13 = arith.constant dense<0.000000e+00> : vector<8x128xf32>
    %16 = tpu.matmul %14, %15, %cst_13 {dimension_numbers = #tpu.dot_dimension_numbers<[1], [0], [0], [1], [0, 0, 1, 1], [], []>} : vector<8x128xbf16>, vector<128x128xbf16>, vector<8x128xf32> -> vector<8x128xf32>
    %c0_14 = arith.constant 0 : index
    %c0_15 = arith.constant 0 : index
    %17 = vector.load %arg7[%c0_14, %c0_15] : memref<1x128xf32, #tpu.memory_space<vmem>>, vector<1x128xf32>
    %18 = vector.broadcast %17 : vector<1x128xf32> to vector<8x128xf32>
    %19 = arith.addf %16, %18 : vector<8x128xf32>
    %cst_16 = arith.constant 0.000000e+00 : f32
    %20 = vector.broadcast %cst_16 : f32 to vector<8x128xf32>
    %21 = arith.maximumf %19, %20 : vector<8x128xf32>
    %22 = arith.truncf %21 : vector<8x128xf32> to vector<8x128xbf16>
    %c0_17 = arith.constant 0 : index
    %c0_18 = arith.constant 0 : index
    %23 = vector.load %arg8[%c0_17, %c0_18] : memref<128x128xbf16, #tpu.memory_space<vmem>>, vector<128x128xbf16>
    %cst_19 = arith.constant dense<0.000000e+00> : vector<8x128xf32>
    %24 = tpu.matmul %22, %23, %cst_19 {dimension_numbers = #tpu.dot_dimension_numbers<[1], [0], [0], [1], [0, 0, 1, 1], [], []>} : vector<8x128xbf16>, vector<128x128xbf16>, vector<8x128xf32> -> vector<8x128xf32>
    %c0_20 = arith.constant 0 : index
    %c0_21 = arith.constant 0 : index
    %25 = vector.load %arg9[%c0_20, %c0_21] : memref<1x128xf32, #tpu.memory_space<vmem>>, vector<1x128xf32>
    %26 = vector.broadcast %25 : vector<1x128xf32> to vector<8x128xf32>
    %27 = arith.addf %24, %26 : vector<8x128xf32>
    %c0_22 = arith.constant 0 : index
    %c0_23 = arith.constant 0 : index
    %28 = vector.load %arg10[%c0_22, %c0_23] : memref<8x128xf32, #tpu.memory_space<vmem>>, vector<8x128xf32>
    tpu.vector_store %arg10[%c0_22, %c0_23], %27 {strides = array<i32>} : memref<8x128xf32, #tpu.memory_space<vmem>>, vector<8x128xf32>,
    return
  }
  func.func @transform_0(%arg0: i32) -> (i32, i32) {
    %c0_i32 = arith.constant 0 : i32
    %c0_i32_0 = arith.constant 0 : i32
    return %arg0, %c0_i32 : i32, i32
  }
  func.func @transform_1(%arg0: i32) -> (i32, i32) {
    %c0_i32 = arith.constant 0 : i32
    %c0_i32_0 = arith.constant 0 : i32
    return %arg0, %c0_i32 : i32, i32
  }
  func.func @transform_2(%arg0: i32) -> (i32, i32) {
    %c0_i32 = arith.constant 0 : i32
    %c0_i32_0 = arith.constant 0 : i32
    %c0_i32_1 = arith.constant 0 : i32
    return %c0_i32, %c0_i32_0 : i32, i32
  }
  func.func @transform_3(%arg0: i32) -> (i32, i32) {
    %c0_i32 = arith.constant 0 : i32
    %c0_i32_0 = arith.constant 0 : i32
    %c0_i32_1 = arith.constant 0 : i32
    return %c0_i32, %c0_i32_0 : i32, i32
  }
  func.func @transform_4(%arg0: i32) -> (i32, i32) {
    %c0_i32 = arith.constant 0 : i32
    %c0_i32_0 = arith.constant 0 : i32
    %c0_i32_1 = arith.constant 0 : i32
    return %c0_i32, %c0_i32_0 : i32, i32
  }
  func.func @transform_5(%arg0: i32) -> (i32, i32) {
    %c0_i32 = arith.constant 0 : i32
    %c0_i32_0 = arith.constant 0 : i32
    %c0_i32_1 = arith.constant 0 : i32
    return %c0_i32, %c0_i32_0 : i32, i32
  }
  func.func @transform_6(%arg0: i32) -> (i32, i32) {
    %c0_i32 = arith.constant 0 : i32
    %c0_i32_0 = arith.constant 0 : i32
    %c0_i32_1 = arith.constant 0 : i32
    return %c0_i32, %c0_i32_0 : i32, i32
  }
  func.func @transform_7(%arg0: i32) -> (i32, i32) {
    %c0_i32 = arith.constant 0 : i32
    %c0_i32_0 = arith.constant 0 : i32
    %c0_i32_1 = arith.constant 0 : i32
    return %c0_i32, %c0_i32_0 : i32, i32
  }
  func.func @transform_8(%arg0: i32) -> (i32, i32) {
    %c0_i32 = arith.constant 0 : i32
    %c0_i32_0 = arith.constant 0 : i32
    %c0_i32_1 = arith.constant 0 : i32
    return %c0_i32, %c0_i32_0 : i32, i32
  }
  func.func @transform_9(%arg0: i32) -> (i32, i32) {
    %c0_i32 = arith.constant 0 : i32
    %c0_i32_0 = arith.constant 0 : i32
    return %arg0, %c0_i32 : i32, i32
  }
}

</mosaic_0001>

<llo_original>
// kernel: tpu_custom_call.1
$region0: #{tpu_custom_call.1}
  #allocation0 [shape = 'u32[]', space=smem, size = 0x4, offset = 0x4, fixed_abs, tag = 'smem constant byte address 0x4 - core index']
  #allocation1 [shape = 'u32[72,128]{1,0:T(1,128)}', space=vmem, size = 0x9000, scoped, tag = 'internal scratch']
  %s0 = inlined_call_operand.vmem [shape: f32[8,8], index: 0, kind: input, shape index: {}]
  %s1 = inlined_call_operand.vmem [shape: f32[8,4], index: 1, kind: input, shape index: {}]
  %s2 = inlined_call_operand.vmem [shape: bf16[8,128], index: 2, kind: input, shape index: {}]
  %s3 = inlined_call_operand.vmem [shape: bf16[4,128], index: 3, kind: input, shape index: {}]
  %s4 = inlined_call_operand.vmem [shape: f32[1,128], index: 4, kind: input, shape index: {}]
  %s5 = inlined_call_operand.hbm [shape: bf16[128,128], index: 5, kind: input, shape index: {}]
  %s6 = inlined_call_operand.vmem [shape: f32[1,128], index: 6, kind: input, shape index: {}]
  %s7 = inlined_call_operand.hbm [shape: bf16[128,128], index: 7, kind: input, shape index: {}]
  %s8 = inlined_call_operand.vmem [shape: f32[1,128], index: 8, kind: input, shape index: {}]
  %s9 = inlined_call_operand.hbm [shape: f32[8,128], index: 9, kind: output, shape index: {}]
  %s10 = sld [smem:[#allocation0]]
  $region54: #{tpu_custom_call.1} parent=0
    _
  %s12 = ssub.s32 1, %s10
  %s13 = scalar_select 0, %s12, %s10
  $region1: #{tpu_custom_call.1} parent=0
    #allocation2 [shape = 'u8[32768]{0}', space=vmem, size = 0x8000, scoped, tag = 'input window, operand 5, single buffered']
    #allocation3 [shape = 's32[1]{0}', space=sflag, size = 0x4, scoped, tag = 'scoped memory for tpu_custom_call.1']
    #allocation4 [shape = 's32[1]{0}', space=sflag, size = 0x4, scoped, tag = 'scoped memory for tpu_custom_call.1']
    #allocation5 [shape = 'u8[32768]{0}', space=vmem, size = 0x8000, scoped, tag = 'input window, operand 7, single buffered']
    #allocation6 [shape = 's32[1]{0}', space=sflag, size = 0x4, scoped, tag = 'scoped memory for tpu_custom_call.1']
    #allocation7 [shape = 'u8[4096]{0}', space=vmem, size = 0x1000, scoped, tag = 'output window, operand 0, single buffered']
    %14 = vsyncpa [#allocation3], 0
    %15 = vsyncpa [#allocation6], 0
    %16 = vsyncpa [#allocation4], 0
    // Predicated region
    $region2: #{tpu_custom_call.1} parent=1 // pred_check
      _
    $region3: #{tpu_custom_call.1} parent=1 // pred_check_branch
      %18 = sbr.rel (0) target = $region5
    $region4: #{tpu_custom_call.1} parent=1 // pred_region
      _
    $region5: #{tpu_custom_call.1} parent=1 // pred_fallthru
      _
    // Predicated region
    $region6: #{tpu_custom_call.1} parent=1 // pred_check
      _
    $region7: #{tpu_custom_call.1} parent=1 // pred_check_branch
      %20 = sbr.rel (0) target = $region9
    $region8: #{tpu_custom_call.1} parent=1 // pred_region
      _
    $region9: #{tpu_custom_call.1} parent=1 // pred_fallthru
      _
    // Predicated region
    $region10: #{tpu_custom_call.1} parent=1 // pred_check
      _
    $region11: #{tpu_custom_call.1} parent=1 // pred_check_branch
      %22 = sbr.rel (0) target = $region13
    $region12: #{tpu_custom_call.1} parent=1 // pred_region
      _
    $region13: #{tpu_custom_call.1} parent=1 // pred_fallthru
      _
    // Predicated region
    $region14: #{tpu_custom_call.1} parent=1 // pred_check
      _
    $region15: #{tpu_custom_call.1} parent=1 // pred_check_branch
      %24 = sbr.rel (0) target = $region17
    $region16: #{tpu_custom_call.1} parent=1 // pred_region
      _
    $region17: #{tpu_custom_call.1} parent=1 // pred_fallthru
      _
    // Predicated region
    $region18: #{tpu_custom_call.1} parent=1 // pred_check
      _
    $region19: #{tpu_custom_call.1} parent=1 // pred_check_branch
      %26 = sbr.rel (0) target = $region21
    $region20: #{tpu_custom_call.1} parent=1 // pred_region
      _
    $region21: #{tpu_custom_call.1} parent=1 // pred_fallthru
      _
    // Predicated region
    $region22: #{tpu_custom_call.1} parent=1 // pred_check
      _
    $region23: #{tpu_custom_call.1} parent=1 // pred_check_branch
      %28 = sbr.rel (0) target = $region25
    $region24: #{tpu_custom_call.1} parent=1 // pred_region
      %30 = vsyncadd [#allocation3], 0
      %s31 = sshll.u32 %s5, 4
      %s32 = int_to_ptr.hbm [resolvable:$true] %s31
      %s33 = sshll.u32 [#allocation2], 4
      %s34 = int_to_ptr.vmem [resolvable:$true] %s33
      %39 = dma.hbm_to_vmem [thread:$0]  %s32, 1024, %s34, [#allocation3], 64, 64, 4
    $region25: #{tpu_custom_call.1} parent=1 // pred_fallthru
      _
    // Predicated region
    $region26: #{tpu_custom_call.1} parent=1 // pred_check
      _
    $region27: #{tpu_custom_call.1} parent=1 // pred_check_branch
      %41 = sbr.rel (0) target = $region29
    $region28: #{tpu_custom_call.1} parent=1 // pred_region
      _
    $region29: #{tpu_custom_call.1} parent=1 // pred_fallthru
      _
    // Predicated region
    $region30: #{tpu_custom_call.1} parent=1 // pred_check
      _
    $region31: #{tpu_custom_call.1} parent=1 // pred_check_branch
      %43 = sbr.rel (0) target = $region33
    $region32: #{tpu_custom_call.1} parent=1 // pred_region
      %45 = vsyncadd [#allocation6], 0
      %s46 = sshll.u32 %s7, 4
      %s47 = int_to_ptr.hbm [resolvable:$true] %s46
      %s48 = sshll.u32 [#allocation5], 4
      %s49 = int_to_ptr.vmem [resolvable:$true] %s48
      %54 = dma.hbm_to_vmem [thread:$0]  %s47, 1024, %s49, [#allocation6], 64, 64, 4
    $region33: #{tpu_custom_call.1} parent=1 // pred_fallthru
      _
    // Predicated region
    $region34: #{tpu_custom_call.1} parent=1 // pred_check
      _
    $region35: #{tpu_custom_call.1} parent=1 // pred_check_branch
      %56 = sbr.rel (0) target = $region37
    $region36: #{tpu_custom_call.1} parent=1 // pred_region
      _
    $region37: #{tpu_custom_call.1} parent=1 // pred_fallthru
      _
    // Predicated region
    $region38: #{tpu_custom_call.1} parent=1 // pred_check
      _
    $region39: #{tpu_custom_call.1} parent=1 // pred_check_branch
      %58 = sbr.rel (0) target = $region41
    $region40: #{tpu_custom_call.1} parent=1 // pred_region
      %60 = dma.done [#allocation3], 1024
    $region41: #{tpu_custom_call.1} parent=1 // pred_fallthru
      _
    // Predicated region
    $region42: #{tpu_custom_call.1} parent=1 // pred_check
      _
    $region43: #{tpu_custom_call.1} parent=1 // pred_check_branch
      %62 = sbr.rel (0) target = $region45
    $region44: #{tpu_custom_call.1} parent=1 // pred_region
      %64 = dma.done [#allocation6], 1024
    $region45: #{tpu_custom_call.1} parent=1 // pred_fallthru
      _
    %v66 = vld [vmem:[%s0] sm:$0xff]
    %v67 = vpack.c.bf16 %v66, %v66
    %v68 = vld [vmem:[%s1] sm:$0xff]
    %v69 = vpack.c.bf16 %v68, %v68
    %v70 = vld [vmem:[%s2] sm:$0xf]
    %v71 = vld [vmem:[%s3] sm:$0x3]
    %vm72 = vcmask 31744
    %v74 = vsel %vm72, %v69, 0
    %vm76 = vcmask 1041408
    %v78 = vsel %vm76, %v71, 0
    %80 = vmatpush.bf16.msra.mxu0 0
    %81 = vmatpush.bf16.msra.mxu0 0
    %82 = vmatpush.bf16.msra.mxu0 0
    %83 = vmatpush.bf16.msra.mxu0 0
    %84 = vmatpush.bf16.msra.mxu0 0
    %85 = vmatpush.bf16.msra.mxu0 0
    %86 = vmatpush.bf16.msra.mxu0 0
    %87 = vmatpush.bf16.msra.mxu0 %v78
    %88 = vmatmul.bf16.gmra.mxu0 %v74
    %v89 = vpop.f32.mrf.mxu0
    %v90 = vadd.f32 0.0, %v89
    %v91 = vpop.f32.mrf.mxu0
    %92 = vdwg.mxu0
    %vm93 = vcmask 64512
    %v95 = vsel %vm93, %v67, 0
    %vm97 = vcmask 1043456
    %v99 = vsel %vm97, %v70, 0
    %101 = vmatpush.bf16.msra.mxu0 0
    %102 = vmatpush.bf16.msra.mxu0 0
    %103 = vmatpush.bf16.msra.mxu0 0
    %104 = vmatpush.bf16.msra.mxu0 0
    %105 = vmatpush.bf16.msra.mxu0 0
    %106 = vmatpush.bf16.msra.mxu0 0
    %107 = vmatpush.bf16.msra.mxu0 0
    %108 = vmatpush.bf16.msra.mxu0 %v99
    %109 = vmatmul.bf16.gmra.mxu0 %v95
    %v110 = vpop.f32.mrf.mxu0
    %v111 = vadd.f32 %v90, %v110
    %v112 = vpop.f32.mrf.mxu0
    %113 = vdwg.mxu0
    %v114 = vld [vmem:[%s4] sm:$0x1]
    %v116 = vperm.slane %v114, 0
    %v118 = vadd.f32 %v111, %v116
    %v119 = vmax.f32 %v118, 0.0
    %v120 = vpack.c.bf16 %v119, %v119
    %v121 = vld [vmem:[#allocation2] sm:$0xf]
    %v122 = vld [vmem:[#allocation2 + $0x4] sm:$0xf]
    %v123 = vld [vmem:[#allocation2 + $0x8] sm:$0xf]
    %v124 = vld [vmem:[#allocation2 + $0xc] sm:$0xf]
    %v125 = vld [vmem:[#allocation2 + $0x10] sm:$0xf]
    %v126 = vld [vmem:[#allocation2 + $0x14] sm:$0xf]
    %v127 = vld [vmem:[#allocation2 + $0x18] sm:$0xf]
    %v128 = vld [vmem:[#allocation2 + $0x1c] sm:$0xf]
    %v129 = vld [vmem:[#allocation2 + $0x20] sm:$0xf]
    %v130 = vld [vmem:[#allocation2 + $0x24] sm:$0xf]
    %v131 = vld [vmem:[#allocation2 + $0x28] sm:$0xf]
    %v132 = vld [vmem:[#allocation2 + $0x2c] sm:$0xf]
    %v133 = vld [vmem:[#allocation2 + $0x30] sm:$0xf]
    %v134 = vld [vmem:[#allocation2 + $0x34] sm:$0xf]
    %v135 = vld [vmem:[#allocation2 + $0x38] sm:$0xf]
    %v136 = vld [vmem:[#allocation2 + $0x3c] sm:$0xf]
    %v137 = vld [vmem:[%s6] sm:$0x1]
    %v139 = vperm.slane %v137, 0
    %v157 = vunpack.c.l.b16 %v121
    %v158 = vunpack.c.l.b16 %v122
    %v159 = vunpack.c.l.b16 %v123
    %v160 = vunpack.c.l.b16 %v124
    %v161 = vunpack.c.l.b16 %v125
    %v162 = vunpack.c.l.b16 %v126
    %v163 = vunpack.c.l.b16 %v127
    %v164 = vunpack.c.l.b16 %v128
    %v165 = vunpack.c.l.b16 %v129
    %v166 = vunpack.c.l.b16 %v130
    %v167 = vunpack.c.l.b16 %v131
    %v168 = vunpack.c.l.b16 %v132
    %v169 = vunpack.c.l.b16 %v133
    %v170 = vunpack.c.l.b16 %v134
    %v171 = vunpack.c.l.b16 %v135
    %v172 = vunpack.c.l.b16 %v136
    %v173 = vpack.c.b16 %v158, %v157
    %v174 = vpack.c.b16 %v160, %v159
    %v175 = vpack.c.b16 %v162, %v161
    %v176 = vpack.c.b16 %v164, %v163
    %v177 = vpack.c.b16 %v166, %v165
    %v178 = vpack.c.b16 %v168, %v167
    %v179 = vpack.c.b16 %v170, %v169
    %v180 = vpack.c.b16 %v172, %v171
    %189 = vmatpush.bf16.msra.mxu0 %v180
    %190 = vmatpush.bf16.msra.mxu0 %v179
    %191 = vmatpush.bf16.msra.mxu0 %v178
    %192 = vmatpush.bf16.msra.mxu0 %v177
    %193 = vmatpush.bf16.msra.mxu0 %v176
    %194 = vmatpush.bf16.msra.mxu0 %v175
    %195 = vmatpush.bf16.msra.mxu0 %v174
    %196 = vmatpush.bf16.msra.mxu0 %v173
    %197 = vmatmul.bf16.gmra.mxu0 %v120
    %v198 = vpop.f32.mrf.mxu0
    %v199 = vadd.f32 %v139, %v198
    %v200 = vpop.f32.mrf.mxu0
    %201 = vdwg.mxu0
    %v202 = vmax.f32 %v199, 0.0
    %v203 = vpack.c.bf16 %v202, %v202
    %v204 = vld [vmem:[#allocation5] sm:$0xf]
    %v205 = vld [vmem:[#allocation5 + $0x4] sm:$0xf]
    %v206 = vld [vmem:[#allocation5 + $0x8] sm:$0xf]
    %v207 = vld [vmem:[#allocation5 + $0xc] sm:$0xf]
    %v208 = vld [vmem:[#allocation5 + $0x10] sm:$0xf]
    %v209 = vld [vmem:[#allocation5 + $0x14] sm:$0xf]
    %v210 = vld [vmem:[#allocation5 + $0x18] sm:$0xf]
    %v211 = vld [vmem:[#allocation5 + $0x1c] sm:$0xf]
    %v212 = vld [vmem:[#allocation5 + $0x20] sm:$0xf]
    %v213 = vld [vmem:[#allocation5 + $0x24] sm:$0xf]
    %v214 = vld [vmem:[#allocation5 + $0x28] sm:$0xf]
    %v215 = vld [vmem:[#allocation5 + $0x2c] sm:$0xf]
    %v216 = vld [vmem:[#allocation5 + $0x30] sm:$0xf]
    %v217 = vld [vmem:[#allocation5 + $0x34] sm:$0xf]
    %v218 = vld [vmem:[#allocation5 + $0x38] sm:$0xf]
    %v219 = vld [vmem:[#allocation5 + $0x3c] sm:$0xf]
    %v220 = vld [vmem:[%s8] sm:$0x1]
    %v222 = vperm.slane %v220, 0
    %v240 = vunpack.c.l.b16 %v204
    %v241 = vunpack.c.l.b16 %v205
    %v242 = vunpack.c.l.b16 %v206
    %v243 = vunpack.c.l.b16 %v207
    %v244 = vunpack.c.l.b16 %v208
    %v245 = vunpack.c.l.b16 %v209
    %v246 = vunpack.c.l.b16 %v210
    %v247 = vunpack.c.l.b16 %v211
    %v248 = vunpack.c.l.b16 %v212
    %v249 = vunpack.c.l.b16 %v213
    %v250 = vunpack.c.l.b16 %v214
    %v251 = vunpack.c.l.b16 %v215
    %v252 = vunpack.c.l.b16 %v216
    %v253 = vunpack.c.l.b16 %v217
    %v254 = vunpack.c.l.b16 %v218
    %v255 = vunpack.c.l.b16 %v219
    %v256 = vpack.c.b16 %v241, %v240
    %v257 = vpack.c.b16 %v243, %v242
    %v258 = vpack.c.b16 %v245, %v244
    %v259 = vpack.c.b16 %v247, %v246
    %v260 = vpack.c.b16 %v249, %v248
    %v261 = vpack.c.b16 %v251, %v250
    %v262 = vpack.c.b16 %v253, %v252
    %v263 = vpack.c.b16 %v255, %v254
    %272 = vmatpush.bf16.msra.mxu0 %v263
    %273 = vmatpush.bf16.msra.mxu0 %v262
    %274 = vmatpush.bf16.msra.mxu0 %v261
    %275 = vmatpush.bf16.msra.mxu0 %v260
    %276 = vmatpush.bf16.msra.mxu0 %v259
    %277 = vmatpush.bf16.msra.mxu0 %v258
    %278 = vmatpush.bf16.msra.mxu0 %v257
    %279 = vmatpush.bf16.msra.mxu0 %v256
    %280 = vmatmul.bf16.gmra.mxu0 %v203
    %v281 = vpop.f32.mrf.mxu0
    %v282 = vadd.f32 %v222, %v281
    %v283 = vpop.f32.mrf.mxu0
    %284 = vdwg.mxu0
    %285 = vst [vmem:[#allocation7] sm:$0xff] %v282
    // Predicated region
    $region46: #{tpu_custom_call.1} parent=1 // pred_check
      _
    $region47: #{tpu_custom_call.1} parent=1 // pred_check_branch
      %287 = sbr.rel (0) target = $region49
    $region48: #{tpu_custom_call.1} parent=1 // pred_region
      %289 = vsyncadd [#allocation4], 0
      %s291 = sshll.u32 [#allocation7], 4
      %s292 = int_to_ptr.vmem [resolvable:$true] %s291
      %s293 = sshll.u32 %s9, 4
      %s294 = int_to_ptr.hbm [resolvable:$true] %s293
      %296 = dma.vmem_to_hbm [thread:$0]  %s292, 128, %s294, [#allocation4]
    $region49: #{tpu_custom_call.1} parent=1 // pred_fallthru
      _
    // Predicated region
    $region50: #{tpu_custom_call.1} parent=1 // pred_check
      _
    $region51: #{tpu_custom_call.1} parent=1 // pred_check_branch
      %298 = sbr.rel (0) target = $region53
    $region52: #{tpu_custom_call.1} parent=1 // pred_region
      %300 = dma.done [#allocation4], 128
    $region53: #{tpu_custom_call.1} parent=1 // pred_fallthru
      _
    %301 = vsyncpa [#allocation3], 1
    %302 = vsyncpa [#allocation6], 1
    %303 = vsyncpa [#allocation4], 1

</llo_original>
